<compile_context>
chip_gen: v7x
topology: tpu7x:2x2x1
jax: 0.10.0
libtpu: 0.0.40
codegen_flags: <defaults>
</compile_context>

<pallas_src>
import jax
import jax.numpy as jnp
from jax import lax
from jax.experimental import pallas as pl
from jax.experimental.pallas import tpu as pltpu


_ROW_TILE = 512            # multiple of 8/16/32 -> valid sublane tiling for f32/bf16/int8
_COL_TILE = 1024           # multiple of 128     -> lane-dense, unmasked stores
_MIN_KERNEL_BYTES = 4 << 20  # below this, plain jnp.pad (XLA-fusable) wins


def _make_pad_kernel(n_copy: int, rem: int, zero_start: int):
    """Column blocks are classified statically (closure constants):
         j <  n_copy           : pure copy  (single full-width store)
         j == n_copy (rem > 0) : mixed      (select in vregs, single store)
         j >= zero_start       : pure zero  (single full-width store)
    """

    def kernel(x_ref, o_ref):
        j = pl.program_id(1)

        if n_copy > 0:
            @pl.when(j < n_copy)
            def _copy():
                o_ref[...] = x_ref[...]

        if rem > 0:
            @pl.when(j == n_copy)
            def _mixed():
                # The OOB lanes of the last input block hold garbage; they are
                # masked here and never enter arithmetic.
                cols = lax.broadcasted_iota(jnp.int32, o_ref.shape, 1)
                o_ref[...] = jnp.where(cols < rem, x_ref[...],
                                       jnp.zeros_like(o_ref))

        @pl.when(j >= zero_start)
        def _zero():
            o_ref[...] = jnp.zeros_like(o_ref)

    return kernel


def _padding_pallas(x: jax.Array, pad_length: int) -> jax.Array:
    seq, hidden = x.shape
    out_cols = hidden + pad_length

    row_tile = min(_ROW_TILE, seq)                            # == seq (full dim) if small
    col_tile = min(_COL_TILE, 128 * pl.cdiv(out_cols, 128))   # always a 128-multiple

    grid = (pl.cdiv(seq, row_tile), pl.cdiv(out_cols, col_tile))

    n_copy = hidden // col_tile             # pure-copy column blocks
    rem = hidden - n_copy * col_tile        # valid lanes in the mixed block
    zero_start = n_copy + (1 if rem > 0 else 0)
    # Last input column block we actually need.
    j_in_max = max(0, n_copy - (0 if rem > 0 else 1))

    def in_index(i, j):
        # Pure-zero blocks: pin the input to a constant block so consecutive
        # zero steps (even across row tiles / per-core after the v7x megacore
        # split) keep the same input block index and Pallas skips the DMA.
        row = jnp.where(j >= zero_start, 0, i)
        col = jnp.minimum(j, j_in_max)
        return (row, col)

    def out_index(i, j):
        return (i, j)

    out_kwargs = {}
    if grid[0] * grid[1] >= 3:
        # Writeback-dominated kernel: keep one extra output DMA in flight.
        out_kwargs["pipeline_mode"] = pl.Buffered(3)
    out_spec = pl.BlockSpec((row_tile, col_tile), out_index, **out_kwargs)

    kernel = _make_pad_kernel(n_copy, rem, zero_start)

    return pl.pallas_call(
        kernel,
        out_shape=jax.ShapeDtypeStruct((seq, out_cols), x.dtype),
        grid_spec=pltpu.PrefetchScalarGridSpec(
            num_scalar_prefetch=0,
            grid=grid,
            in_specs=[pl.BlockSpec((row_tile, col_tile), in_index)],
            out_specs=out_spec,
        ),
        compiler_params=pltpu.CompilerParams(
            dimension_semantics=("parallel", "parallel")),
    )(x)


def padding_layer(x: jax.Array, desired_length: int, *,
                  min_kernel_bytes: int = _MIN_KERNEL_BYTES) -> jax.Array:
    """Pallas equivalent of PaddingLayer(desired_length)(x) for 2-D [seq, hidden] x."""
    assert x.ndim == 2, "this kernel implements the 2-D [seq, hidden] case"
    seq, hidden = x.shape
    # Quirk faithfully kept from the PyTorch module: length measured on dim 0,
    # padding applied to the last dim.
    pad_length = max(0, desired_length - seq)
    if pad_length == 0:
        # NOTE: returns the input array itself (no copy) -- fine in pure JAX.
        return x

    out_bytes = seq * (hidden + pad_length) * jnp.dtype(x.dtype).itemsize
    if out_bytes < min_kernel_bytes:
        # Small tensors: a standalone pallas_call cannot beat XLA's (fusable) pad.
        return jnp.pad(x, ((0, 0), (0, pad_length)))
    return _padding_pallas(x, pad_length)


if __name__ == "__main__":
    key = jax.random.PRNGKey(0)

    # --- case 1: small shape from the module spec (seq=8, hidden=32) ---------
    seq, hidden, desired = 8, 32, 16                 # pad_length = 8 -> out (8, 40)
    x_small = jax.random.normal(key, (seq, hidden), dtype=jnp.float32)
    ref_small = jnp.pad(x_small, ((0, 0), (0, max(0, desired - seq))))

    out_dispatch = jax.block_until_ready(padding_layer(x_small, desired))
    out_kernel = jax.block_until_ready(
        padding_layer(x_small, desired, min_kernel_bytes=0))   # force the Pallas path
    assert out_dispatch.shape == ref_small.shape, out_dispatch.shape
    assert jnp.array_equal(out_dispatch, ref_small), "dispatch mismatch vs reference"
    assert out_kernel.shape == ref_small.shape, out_kernel.shape
    assert jnp.array_equal(out_kernel, ref_small), "kernel mismatch vs reference"

    # --- case 2: gridded path exercising copy / mixed / zero column blocks and
    #             the row-pinned zero-block index_map (grid = (2, 3)) ---------
    seq2, hidden2, desired2 = 640, 1152, 1664        # pad = 1024 -> out (640, 2176)
    x_mid = jax.random.normal(jax.random.PRNGKey(0), (seq2, hidden2), dtype=jnp.float32)
    ref_mid = jnp.pad(x_mid, ((0, 0), (0, max(0, desired2 - seq2))))
    out_mid = jax.block_until_ready(padding_layer(x_mid, desired2))   # > 4 MiB -> kernel path
    assert out_mid.shape == ref_mid.shape, out_mid.shape
    assert jnp.array_equal(out_mid, ref_mid), "gridded kernel mismatch vs reference"

    # --- case 3: no padding needed -> input returned unchanged ---------------
    out_noop = padding_layer(x_small, 4)
    assert out_noop.shape == x_small.shape

    print("KERNEL_OK")
</pallas_src>

<mosaic_0001>
module attributes {stable_mosaic.version = 11 : i64} {
  func.func @kernel(%arg0: i32, %arg1: i32, %arg2: memref<8x128xf32, #tpu.memory_space<vmem>>, %arg3: memref<8x128xf32, #tpu.memory_space<vmem>>) attributes {dimension_semantics = [#tpu.dimension_semantics<parallel>, #tpu.dimension_semantics<parallel>], iteration_bounds = array<i64: 1, 1>, scalar_prefetch = 0 : i64, scratch_operands = 0 : i64, tpu.core_type = #tpu.core_type<tc>, window_params = [{transform_indices = @transform_0, window_bounds = array<i64: 8, 128>}, {transform_indices = @transform_1, window_bounds = array<i64: 8, 128>}]} {
    %c0_i32 = arith.constant 0 : i32
    %0 = arith.cmpi eq, %arg1, %c0_i32 : i32
    %1 = arith.extui %0 : i1 to i32
    %c0_i32_0 = arith.constant 0 : i32
    %2 = arith.cmpi ne, %1, %c0_i32_0 : i32
    scf.if %2 {
      %6 = tpu.iota {dimensions = array<i32: 1>} : vector<8x128xi32>
      %c32_i32 = arith.constant 32 : i32
      %7 = vector.broadcast %c32_i32 : i32 to vector<8x128xi32>
      %8 = arith.cmpi slt, %6, %7 : vector<8x128xi32>
      %c0 = arith.constant 0 : index
      %c0_2 = arith.constant 0 : index
      %9 = vector.load %arg2[%c0, %c0_2] : memref<8x128xf32, #tpu.memory_space<vmem>>, vector<8x128xf32>
      %cst = arith.constant 0.000000e+00 : f32
      %10 = vector.broadcast %cst : f32 to vector<8x128xf32>
      %11 = arith.select %8, %9, %10 : vector<8x128xi1>, vector<8x128xf32>
      %c0_3 = arith.constant 0 : index
      %c0_4 = arith.constant 0 : index
      %12 = vector.load %arg3[%c0_3, %c0_4] : memref<8x128xf32, #tpu.memory_space<vmem>>, vector<8x128xf32>
      tpu.vector_store %arg3[%c0_3, %c0_4], %11 {strides = array<i32>} : memref<8x128xf32, #tpu.memory_space<vmem>>, vector<8x128xf32>,
    } else {
    }
    %c1_i32 = arith.constant 1 : i32
    %3 = arith.cmpi sge, %arg1, %c1_i32 : i32
    %4 = arith.extui %3 : i1 to i32
    %c0_i32_1 = arith.constant 0 : i32
    %5 = arith.cmpi ne, %4, %c0_i32_1 : i32
    scf.if %5 {
      %cst = arith.constant 0.000000e+00 : f32
      %6 = vector.broadcast %cst : f32 to vector<8x128xf32>
      %c0 = arith.constant 0 : index
      %c0_2 = arith.constant 0 : index
      %7 = vector.load %arg3[%c0, %c0_2] : memref<8x128xf32, #tpu.memory_space<vmem>>, vector<8x128xf32>
      tpu.vector_store %arg3[%c0, %c0_2], %6 {strides = array<i32>} : memref<8x128xf32, #tpu.memory_space<vmem>>, vector<8x128xf32>,
    } else {
    }
    return
  }
  func.func @transform_0(%arg0: i32, %arg1: i32) -> (i32, i32) {
    %c1_i32 = arith.constant 1 : i32
    %0 = arith.cmpi sge, %arg1, %c1_i32 : i32
    %c0_i32 = arith.constant 0 : i32
    %1 = arith.select %0, %c0_i32, %arg0 : i32
    %c0_i32_0 = arith.constant 0 : i32
    %2 = arith.minsi %arg1, %c0_i32_0 : i32
    %c0_i32_1 = arith.constant 0 : i32
    return %1, %2 : i32, i32
  }
  func.func @transform_1(%arg0: i32, %arg1: i32) -> (i32, i32) {
    %c0_i32 = arith.constant 0 : i32
    return %arg0, %arg1 : i32, i32
  }
}

</mosaic_0001>

<llo_original>
// kernel: tpu_custom_call.1
$region0: #{tpu_custom_call.1}
  #allocation0 [shape = 'u32[]', space=smem, size = 0x4, offset = 0x4, fixed_abs, tag = 'smem constant byte address 0x4 - core index']
  #allocation1 [shape = 'u32[144,128]{1,0:T(1,128)}', space=vmem, size = 0x12000, scoped, tag = 'internal scratch']
  %s0 = inlined_call_operand.hbm [shape: f32[8,32], index: 0, kind: input, shape index: {}]
  %s1 = inlined_call_operand.hbm [shape: f32[8,40], index: 1, kind: output, shape index: {}]
  %s2 = sld [smem:[#allocation0]]
  $region26: #{tpu_custom_call.1} parent=0
    _
  %s4 = ssub.s32 1, %s2
  %s5 = scalar_select 0, %s4, %s2
  $region1: #{tpu_custom_call.1} parent=0
    #allocation2 [shape = 'u8[4096]{0}', space=vmem, size = 0x1000, scoped, tag = 'input window, operand 0, single buffered']
    #allocation3 [shape = 's32[1]{0}', space=sflag, size = 0x4, scoped, tag = 'scoped memory for tpu_custom_call.1']
    #allocation4 [shape = 's32[1]{0}', space=sflag, size = 0x4, scoped, tag = 'scoped memory for tpu_custom_call.1']
    #allocation5 [shape = 'u8[4096]{0}', space=vmem, size = 0x1000, scoped, tag = 'output window, operand 0, single buffered']
    %6 = vsyncpa [#allocation3], 0
    %7 = vsyncpa [#allocation4], 0
    // Predicated region
    $region2: #{tpu_custom_call.1} parent=1 // pred_check
      _
    $region3: #{tpu_custom_call.1} parent=1 // pred_check_branch
      %9 = sbr.rel (0) target = $region5
    $region4: #{tpu_custom_call.1} parent=1 // pred_region
      %p10 = scmp.ge.s32.totalorder 0, 1
      %s11 = scalar_select %p10, 0, 0
      %s13 = ssub.s32 128, 128
      %14 = vsyncadd [#allocation3], %s13
      %s15 = smul.addr %s11, 128
      %s16 = scalar_lea.hbm %s0, %s15
      %s18 = sshll.u32 [#allocation2], 4
      %s19 = int_to_ptr.vmem [resolvable:$true] %s18
      %21 = dma.hbm_to_vmem [thread:$0]  %s16, 128, %s19, [#allocation3]
    $region5: #{tpu_custom_call.1} parent=1 // pred_fallthru
      _
    // Predicated region
    $region6: #{tpu_custom_call.1} parent=1 // pred_check
      _
    $region7: #{tpu_custom_call.1} parent=1 // pred_check_branch
      %23 = sbr.rel (0) target = $region9
    $region8: #{tpu_custom_call.1} parent=1 // pred_region
      %24 = dma.done [#allocation3], 128
    $region9: #{tpu_custom_call.1} parent=1 // pred_fallthru
      _
    %p25 = scmp.ge.s32.totalorder 0, 1
    %s26 = scalar_select %p25, 0, 0
    %p27 = scmp.eq.s32.totalorder 0, 0
    // Predicated region
    $region10: #{tpu_custom_call.1} parent=1 // pred_check
      %p28 = pneg %p27
    $region11: #{tpu_custom_call.1} parent=1 // pred_check_branch
      %30 = sbr.rel (%p28) target = $region13
    $region12: #{tpu_custom_call.1} parent=1 // pred_region
      %v31 = vlaneseq
      %v32 = vand.u32 %v31, 127
      %vm33 = vcmp.lt.s32.totalorder %v32, 32
      %v34 = vld [vmem:[#allocation2] sm:$0xff]
      %v35 = vsel %vm33, %v34, 0.0
      %36 = vst [vmem:[#allocation5] sm:$0xff] %v35
    $region13: #{tpu_custom_call.1} parent=1 // pred_fallthru
      _
    %p37 = scmp.ge.s32.totalorder 0, 1
    // Predicated region
    $region14: #{tpu_custom_call.1} parent=1 // pred_check
      %p38 = pneg %p37
    $region15: #{tpu_custom_call.1} parent=1 // pred_check_branch
      %40 = sbr.rel (%p38) target = $region17
    $region16: #{tpu_custom_call.1} parent=1 // pred_region
      %41 = vst [vmem:[#allocation5] sm:$0xff] 0.0
    $region17: #{tpu_custom_call.1} parent=1 // pred_fallthru
      _
    // Predicated region
    $region18: #{tpu_custom_call.1} parent=1 // pred_check
      _
    $region19: #{tpu_custom_call.1} parent=1 // pred_check_branch
      %43 = sbr.rel (0) target = $region21
    $region20: #{tpu_custom_call.1} parent=1 // pred_region
      %s45 = ssub.s32 128, 128
      %46 = vsyncadd [#allocation4], %s45
      %s48 = sshll.u32 [#allocation5], 4
      %s49 = int_to_ptr.vmem [resolvable:$true] %s48
      %51 = dma.vmem_to_hbm [thread:$0]  %s49, 128, %s1, [#allocation4]
    $region21: #{tpu_custom_call.1} parent=1 // pred_fallthru
      _
    // Predicated region
    $region22: #{tpu_custom_call.1} parent=1 // pred_check
      _
    $region23: #{tpu_custom_call.1} parent=1 // pred_check_branch
      %53 = sbr.rel (0) target = $region25
    $region24: #{tpu_custom_call.1} parent=1 // pred_region
      %54 = dma.done [#allocation4], 128
    $region25: #{tpu_custom_call.1} parent=1 // pred_fallthru
      _
    %55 = vsyncpa [#allocation3], 1
    %56 = vsyncpa [#allocation4], 1

</llo_original>
